<compile_context>
chip_gen: v7x
topology: tpu7x:2x2x1
jax: 0.10.0
libtpu: 0.0.40
codegen_flags: <defaults>
</compile_context>

<pallas_src>
import functools
import math

import jax
import jax.numpy as jnp
from jax.experimental import pallas as pl
from jax.experimental.pallas import tpu as pltpu


def _csa_kernel(x_ref, wkT_ref, params_ref, rep_ref, w2_ref, o_ref, *, eps):
    """One grid step = a block of TA batches, ALL heads.

    x_ref      : (TA, S, D)     raw input block
    wkT_ref    : (D, C)         W_key_fc.weight^T                (grid-invariant)
    params_ref : (3, P)         row0=b_key[:C], row1=gamma[:D], row2=beta[:D]
    rep_ref    : (D, C*D)       0/1 lane-replicate matrix rep[o, c*D+o'] = (o==o')
    w2_ref     : (C*D, Npad)    w2[c*D+o, h*D+j] = W_value[h,c,o,j]; lanes >= H*D are 0
    o_ref      : (TA, S, Npad)  out[a, s, h*D+j] = output[a, h, s, j] (padded lanes)
    """
    x = x_ref[...]                                                  # (TA, S, D) f32
    TA, S, D = x.shape
    C = wkT_ref.shape[-1]
    CD = rep_ref.shape[-1]                                          # C * D

    p = params_ref[...]                                             # (3, P)
    bk = p[0:1, :C]                                                 # (1, C)
    gamma = p[1:2, :D]                                              # (1, D)
    beta = p[2:3, :D]                                               # (1, D)

    # ---- LayerNorm over the feature dim (biased variance), per row ----
    mean = jnp.mean(x, axis=-1, keepdims=True)
    var = jnp.mean(jnp.square(x - mean), axis=-1, keepdims=True)
    xn = (x - mean) * jax.lax.rsqrt(var + eps) * gamma + beta       # (TA, S, D)

    # ---- concept weights: keys on the RAW input, one matmul for the whole block ----
    x2 = x.reshape(TA * S, D)                                       # leading-dim merge (free)
    k_logits = jnp.dot(x2, wkT_ref[...],
                       preferred_element_type=jnp.float32) + bk     # (TA*S, C)
    k = jax.nn.sigmoid(k_logits)
    ksum = jnp.sum(k.reshape(TA, S, C), axis=1)                     # (TA, C)
    ksum = ksum - jnp.max(ksum, axis=-1, keepdims=True)
    e = jnp.exp(ksum)
    conc = e / jnp.sum(e, axis=-1, keepdims=True)                   # (TA, C) softmax

    # ---- scaled-input value path ----
    # replicate xn along lanes (D -> C*D) on the MXU via the constant 0/1 matrix
    xn2 = xn.reshape(TA * S, D)
    xn_rep = jnp.dot(xn2, rep_ref[...],
                     preferred_element_type=jnp.float32)            # (TA*S, C*D)
    # per-lane concept scale: scale[a, c*D + o] = conc[a, c]
    lane = jax.lax.broadcasted_iota(jnp.int32, (1, CD), 1)
    scale = jnp.zeros((TA, CD), jnp.float32)
    for c in range(C):                                              # C small & static
        in_chunk = (lane >= c * D) & (lane < (c + 1) * D)
        scale = jnp.where(in_chunk, conc[:, c:c + 1], scale)
    y = xn_rep.reshape(TA, S, CD) * scale[:, None, :]               # (TA, S, C*D)
    y2 = y.reshape(TA * S, CD)

    # ---- single MXU matmul: all heads, all batches of the block ----
    out = jnp.dot(y2, w2_ref[...],
                  preferred_element_type=jnp.float32)               # (TA*S, Npad)
    o_ref[...] = out.reshape(TA, S, o_ref.shape[-1]).astype(o_ref.dtype)


def _pick_batch_block(A, S, D, Npad, itemsize, budget_bytes=8 * 1024 * 1024):
    """Largest divisor of A whose double-buffered x/out blocks fit the budget."""
    ta = A
    while ta > 1 and (A % ta != 0
                      or 2 * ta * S * (D + Npad) * itemsize > budget_bytes):
        ta -= 1
    return max(ta, 1)


def conceptualized_self_attention(x, wk, bk, gamma, beta, wv, *, eps=1e-5):
    """x: (A, 1, S, D); wk: (C, D); bk: (C,); gamma/beta: (D,); wv: (H, C, O, D)."""
    A, one, S, D = x.shape
    assert one == 1
    H, C, O, Din = wv.shape
    assert Din == D and O == D, "reference matmul requires output_dim == input_dim"

    dt = x.dtype
    x3 = x.reshape(A, S, D)
    wk_t = jnp.transpose(wk).astype(dt)                             # (D, C)

    # tiny per-feature vectors packed into ONE small operand
    P = max(C, D)
    params = jnp.zeros((3, P), dt)
    params = params.at[0, :C].set(bk.astype(dt))
    params = params.at[1, :D].set(gamma.astype(dt))
    params = params.at[2, :D].set(beta.astype(dt))

    # constant 0/1 lane-replication matrix: rep[o, c*D + o'] = (o == o')
    rep = jnp.tile(jnp.eye(D, dtype=dt), (1, C))                    # (D, C*D)

    # flattened, lane-dense value weight: w2[c*D + o, h*D + j] = W_value[h, c, o, j]
    HD = H * D
    Npad = ((HD + 127) // 128) * 128                                # lane-dense output
    w2 = jnp.transpose(wv, (1, 2, 0, 3)).reshape(C * D, HD).astype(dt)
    if Npad != HD:
        w2 = jnp.pad(w2, ((0, 0), (0, Npad - HD)))

    itemsize = jnp.dtype(dt).itemsize
    TA = _pick_batch_block(A, S, D, Npad, itemsize)
    grid = (A // TA,)

    flops = (2 * A * S * C * D * Npad                               # value matmul
             + 2 * A * S * D * C * D                                # lane replicate
             + 2 * A * S * D * C                                    # key matmul
             + 12 * A * S * D)                                      # layernorm / scaling
    transcendentals = A * S * C + A * C + A * S
    bytes_accessed = itemsize * (A * S * D + D * C + 3 * P + D * C * D
                                 + C * D * Npad + A * S * Npad)

    kernel = functools.partial(_csa_kernel, eps=eps)
    out_flat = pl.pallas_call(
        kernel,
        out_shape=jax.ShapeDtypeStruct((A, S, Npad), dt),
        grid_spec=pltpu.PrefetchScalarGridSpec(
            num_scalar_prefetch=0,
            grid=grid,
            in_specs=[
                pl.BlockSpec((TA, S, D), lambda a: (a, 0, 0)),      # x (per batch-block)
                pl.BlockSpec((D, C), lambda a: (0, 0)),             # Wk^T       (invariant)
                pl.BlockSpec((3, P), lambda a: (0, 0)),             # param pack (invariant)
                pl.BlockSpec((D, C * D), lambda a: (0, 0)),         # replicate  (invariant)
                pl.BlockSpec((C * D, Npad), lambda a: (0, 0)),      # W_value    (invariant)
            ],
            out_specs=pl.BlockSpec((TA, S, Npad), lambda a: (a, 0, 0)),
        ),
        compiler_params=pltpu.CompilerParams(
            dimension_semantics=("parallel",),
            vmem_limit_bytes=32 * 1024 * 1024,
        ),
        cost_estimate=pl.CostEstimate(flops=flops,
                                      transcendentals=transcendentals,
                                      bytes_accessed=bytes_accessed),
    )(x3, wk_t, params, rep, w2)

    # Slice off the lane padding; restore the module's (A, H, S, D) layout outside
    # the kernel.  (Kept only because the spec requires that layout; drop / fuse
    # into the consumer if (A, S, H, D) is acceptable downstream.)
    return out_flat[..., :HD].reshape(A, S, H, D).transpose(0, 2, 1, 3)


def reference(x, wk, bk, gamma, beta, wv, eps=1e-5):
    """Plain-JAX, HIGHEST-precision mirror of the PyTorch forward."""
    mean = jnp.mean(x, axis=-1, keepdims=True)
    var = jnp.mean(jnp.square(x - mean), axis=-1, keepdims=True)
    xn = (x - mean) / jnp.sqrt(var + eps) * gamma + beta                      # (A,1,S,D)
    k = jax.nn.sigmoid(
        jnp.einsum('aosd,cd->aosc', x, wk,
                   precision=jax.lax.Precision.HIGHEST) + bk)                 # (A,1,S,C)
    conc = jax.nn.softmax(jnp.sum(k, axis=2), axis=-1)[:, 0, :]               # (A,C)
    values = jnp.einsum('aso,hcoj->ahcsj', xn[:, 0], wv,
                        precision=jax.lax.Precision.HIGHEST)                  # (A,H,C,S,D)
    return jnp.einsum('ac,ahcsj->ahsj', conc, values,
                      precision=jax.lax.Precision.HIGHEST)                    # (A,H,S,D)


if __name__ == "__main__":
    # Small shapes consistent with the module's forward.
    A, S, D, C, H = 2, 8, 32, 4, 2   # batch, seq, input_dim(=output_dim), concepts, heads

    key = jax.random.PRNGKey(0)
    k1, k2, k3, k4 = jax.random.split(key, 4)
    x = jax.random.normal(k1, (A, 1, S, D), dtype=jnp.float32)
    # W_value ~ torch.rand(H, C, output_dim, input_dim)
    wv = jax.random.uniform(k2, (H, C, D, D), dtype=jnp.float32)
    # W_key_fc: nn.Linear(D, C) default init (uniform in +-1/sqrt(D))
    bound = 1.0 / math.sqrt(D)
    wk = jax.random.uniform(k3, (C, D), minval=-bound, maxval=bound, dtype=jnp.float32)
    bk = jax.random.uniform(k4, (C,), minval=-bound, maxval=bound, dtype=jnp.float32)
    # LayerNorm default init: weight=1, bias=0
    gamma = jnp.ones((D,), jnp.float32)
    beta = jnp.zeros((D,), jnp.float32)

    out = conceptualized_self_attention(x, wk, bk, gamma, beta, wv)
    out = jax.block_until_ready(out)

    ref = reference(x, wk, bk, gamma, beta, wv)
    assert out.shape == (A, H, S, D), out.shape
    # Matmuls run at default (single-pass) MXU precision per the perf review; the
    # scaled-input contraction order is mathematically identical to the reference
    # but rounds differently under bf16 MXU math, hence the loose tolerance.
    if not jnp.allclose(out, ref, atol=8e-2, rtol=2e-2):
        raise AssertionError(
            f"mismatch, max abs err = {float(jnp.max(jnp.abs(out - ref)))}")
    print("KERNEL_OK")
</pallas_src>

<mosaic_0001>
module attributes {stable_mosaic.version = 11 : i64} {
  func.func @_csa_kernel(%arg0: i32, %arg1: memref<2x8x32xf32, #tpu.memory_space<vmem>>, %arg2: memref<32x4xf32, #tpu.memory_space<vmem>>, %arg3: memref<3x32xf32, #tpu.memory_space<vmem>>, %arg4: memref<32x128xf32, #tpu.memory_space<vmem>>, %arg5: memref<128x128xf32, #tpu.memory_space<vmem>>, %arg6: memref<2x8x128xf32, #tpu.memory_space<vmem>>) attributes {dimension_semantics = [#tpu.dimension_semantics<parallel>], iteration_bounds = array<i64: 1>, scalar_prefetch = 0 : i64, scratch_operands = 0 : i64, tpu.core_type = #tpu.core_type<tc>, window_params = [{transform_indices = @transform_0, window_bounds = array<i64: 2, 8, 32>}, {pipeline_mode = #tpu.pipeline_mode<synchronous>, transform_indices = @transform_1, window_bounds = array<i64: 32, 4>}, {pipeline_mode = #tpu.pipeline_mode<synchronous>, transform_indices = @transform_2, window_bounds = array<i64: 3, 32>}, {pipeline_mode = #tpu.pipeline_mode<synchronous>, transform_indices = @transform_3, window_bounds = array<i64: 32, 128>}, {pipeline_mode = #tpu.pipeline_mode<synchronous>, transform_indices = @transform_4, window_bounds = array<i64: 128, 128>}, {transform_indices = @transform_5, window_bounds = array<i64: 2, 8, 128>}]} {
    %c0 = arith.constant 0 : index
    %c0_0 = arith.constant 0 : index
    %c0_1 = arith.constant 0 : index
    %0 = vector.load %arg1[%c0, %c0_0, %c0_1] : memref<2x8x32xf32, #tpu.memory_space<vmem>>, vector<2x8x32xf32>
    %c0_2 = arith.constant 0 : index
    %c0_3 = arith.constant 0 : index
    %1 = vector.load %arg3[%c0_2, %c0_3] : memref<3x32xf32, #tpu.memory_space<vmem>>, vector<3x32xf32>
    %2 = vector.extract_strided_slice %1 {offsets = [0, 0], sizes = [1, 4], strides = [1, 1]} : vector<3x32xf32> to vector<1x4xf32>
    %3 = vector.extract_strided_slice %1 {offsets = [1, 0], sizes = [1, 32], strides = [1, 1]} : vector<3x32xf32> to vector<1x32xf32>
    %4 = vector.extract_strided_slice %1 {offsets = [2, 0], sizes = [1, 32], strides = [1, 1]} : vector<3x32xf32> to vector<1x32xf32>
    %cst = arith.constant dense<0.000000e+00> : vector<2x8xf32>
    %5 = vector.multi_reduction <add>, %0, %cst [2] : vector<2x8x32xf32> to vector<2x8xf32>
    %6 = vector.shape_cast %5 : vector<2x8xf32> to vector<2x8x1xf32>
    %cst_4 = arith.constant 3.200000e+01 : f32
    %7 = vector.broadcast %cst_4 : f32 to vector<2x8x1xf32>
    %8 = arith.divf %6, %7 : vector<2x8x1xf32>
    %9 = vector.broadcast %8 : vector<2x8x1xf32> to vector<2x8x32xf32>
    %10 = arith.subf %0, %9 : vector<2x8x32xf32>
    %11 = arith.mulf %10, %10 : vector<2x8x32xf32>
    %cst_5 = arith.constant dense<0.000000e+00> : vector<2x8xf32>
    %12 = vector.multi_reduction <add>, %11, %cst_5 [2] : vector<2x8x32xf32> to vector<2x8xf32>
    %13 = vector.shape_cast %12 : vector<2x8xf32> to vector<2x8x1xf32>
    %cst_6 = arith.constant 3.200000e+01 : f32
    %14 = vector.broadcast %cst_6 : f32 to vector<2x8x1xf32>
    %15 = arith.divf %13, %14 : vector<2x8x1xf32>
    %16 = vector.broadcast %8 : vector<2x8x1xf32> to vector<2x8x32xf32>
    %17 = arith.subf %0, %16 : vector<2x8x32xf32>
    %cst_7 = arith.constant 9.99999974E-6 : f32
    %18 = vector.broadcast %cst_7 : f32 to vector<2x8x1xf32>
    %19 = arith.addf %15, %18 : vector<2x8x1xf32>
    %20 = math.rsqrt %19 : vector<2x8x1xf32>
    %21 = vector.broadcast %20 : vector<2x8x1xf32> to vector<2x8x32xf32>
    %22 = arith.mulf %17, %21 : vector<2x8x32xf32>
    %23 = vector.shape_cast %3 : vector<1x32xf32> to vector<1x1x32xf32>
    %24 = vector.broadcast %23 : vector<1x1x32xf32> to vector<2x8x32xf32>
    %25 = arith.mulf %22, %24 : vector<2x8x32xf32>
    %26 = vector.shape_cast %4 : vector<1x32xf32> to vector<1x1x32xf32>
    %27 = vector.broadcast %26 : vector<1x1x32xf32> to vector<2x8x32xf32>
    %28 = arith.addf %25, %27 : vector<2x8x32xf32>
    %29 = vector.shape_cast %0 : vector<2x8x32xf32> to vector<16x32xf32>
    %c0_8 = arith.constant 0 : index
    %c0_9 = arith.constant 0 : index
    %30 = vector.load %arg2[%c0_8, %c0_9] : memref<32x4xf32, #tpu.memory_space<vmem>>, vector<32x4xf32>
    %cst_10 = arith.constant dense<0.000000e+00> : vector<16x4xf32>
    %31 = tpu.matmul %29, %30, %cst_10 {dimension_numbers = #tpu.dot_dimension_numbers<[1], [0], [0], [1], [0, 0, 1, 1], [], []>} : vector<16x32xf32>, vector<32x4xf32>, vector<16x4xf32> -> vector<16x4xf32>
    %32 = vector.broadcast %2 : vector<1x4xf32> to vector<16x4xf32>
    %33 = arith.addf %31, %32 : vector<16x4xf32>
    %34 = arith.negf %33 : vector<16x4xf32>
    %35 = math.exp %34 : vector<16x4xf32>
    %cst_11 = arith.constant 1.000000e+00 : f32
    %36 = vector.broadcast %cst_11 : f32 to vector<16x4xf32>
    %37 = arith.addf %36, %35 : vector<16x4xf32>
    %38 = arith.divf %36, %37 : vector<16x4xf32>
    %39 = vector.shape_cast %38 : vector<16x4xf32> to vector<2x8x4xf32>
    %cst_12 = arith.constant dense<0.000000e+00> : vector<2x4xf32>
    %40 = vector.multi_reduction <add>, %39, %cst_12 [1] : vector<2x8x4xf32> to vector<2x4xf32>
    %cst_13 = arith.constant dense<0xFF800000> : vector<2xf32>
    %41 = vector.multi_reduction <maximumf>, %40, %cst_13 [1] : vector<2x4xf32> to vector<2xf32>
    %42 = vector.shape_cast %41 : vector<2xf32> to vector<2x1xf32>
    %43 = vector.broadcast %42 : vector<2x1xf32> to vector<2x4xf32>
    %44 = arith.subf %40, %43 : vector<2x4xf32>
    %45 = math.exp %44 : vector<2x4xf32>
    %cst_14 = arith.constant dense<0.000000e+00> : vector<2xf32>
    %46 = vector.multi_reduction <add>, %45, %cst_14 [1] : vector<2x4xf32> to vector<2xf32>
    %47 = vector.shape_cast %46 : vector<2xf32> to vector<2x1xf32>
    %48 = vector.broadcast %47 : vector<2x1xf32> to vector<2x4xf32>
    %49 = arith.divf %45, %48 : vector<2x4xf32>
    %50 = vector.shape_cast %28 : vector<2x8x32xf32> to vector<16x32xf32>
    %c0_15 = arith.constant 0 : index
    %c0_16 = arith.constant 0 : index
    %51 = vector.load %arg4[%c0_15, %c0_16] : memref<32x128xf32, #tpu.memory_space<vmem>>, vector<32x128xf32>
    %cst_17 = arith.constant dense<0.000000e+00> : vector<16x128xf32>
    %52 = tpu.matmul %50, %51, %cst_17 {dimension_numbers = #tpu.dot_dimension_numbers<[1], [0], [0], [1], [0, 0, 1, 1], [], []>} : vector<16x32xf32>, vector<32x128xf32>, vector<16x128xf32> -> vector<16x128xf32>
    %53 = tpu.iota {dimensions = array<i32: 1>} : vector<1x128xi32>
    %cst_18 = arith.constant 0.000000e+00 : f32
    %54 = vector.broadcast %cst_18 : f32 to vector<2x128xf32>
    %c0_i32 = arith.constant 0 : i32
    %55 = vector.broadcast %c0_i32 : i32 to vector<1x128xi32>
    %56 = arith.cmpi sge, %53, %55 : vector<1x128xi32>
    %c32_i32 = arith.constant 32 : i32
    %57 = vector.broadcast %c32_i32 : i32 to vector<1x128xi32>
    %58 = arith.cmpi slt, %53, %57 : vector<1x128xi32>
    %59 = arith.andi %56, %58 : vector<1x128xi1>
    %60 = vector.extract_strided_slice %49 {offsets = [0, 0], sizes = [2, 1], strides = [1, 1]} : vector<2x4xf32> to vector<2x1xf32>
    %61 = vector.shape_cast %59 : vector<1x128xi1> to vector<1x128xi1>
    %62 = vector.broadcast %61 : vector<1x128xi1> to vector<2x128xi1>
    %63 = vector.shape_cast %60 : vector<2x1xf32> to vector<2x1xf32>
    %64 = vector.broadcast %63 : vector<2x1xf32> to vector<2x128xf32>
    %65 = arith.select %62, %64, %54 : vector<2x128xi1>, vector<2x128xf32>
    %c32_i32_19 = arith.constant 32 : i32
    %66 = vector.broadcast %c32_i32_19 : i32 to vector<1x128xi32>
    %67 = arith.cmpi sge, %53, %66 : vector<1x128xi32>
    %c64_i32 = arith.constant 64 : i32
    %68 = vector.broadcast %c64_i32 : i32 to vector<1x128xi32>
    %69 = arith.cmpi slt, %53, %68 : vector<1x128xi32>
    %70 = arith.andi %67, %69 : vector<1x128xi1>
    %71 = vector.extract_strided_slice %49 {offsets = [0, 1], sizes = [2, 1], strides = [1, 1]} : vector<2x4xf32> to vector<2x1xf32>
    %72 = vector.shape_cast %70 : vector<1x128xi1> to vector<1x128xi1>
    %73 = vector.broadcast %72 : vector<1x128xi1> to vector<2x128xi1>
    %74 = vector.shape_cast %71 : vector<2x1xf32> to vector<2x1xf32>
    %75 = vector.broadcast %74 : vector<2x1xf32> to vector<2x128xf32>
    %76 = arith.select %73, %75, %65 : vector<2x128xi1>, vector<2x128xf32>
    %c64_i32_20 = arith.constant 64 : i32
    %77 = vector.broadcast %c64_i32_20 : i32 to vector<1x128xi32>
    %78 = arith.cmpi sge, %53, %77 : vector<1x128xi32>
    %c96_i32 = arith.constant 96 : i32
    %79 = vector.broadcast %c96_i32 : i32 to vector<1x128xi32>
    %80 = arith.cmpi slt, %53, %79 : vector<1x128xi32>
    %81 = arith.andi %78, %80 : vector<1x128xi1>
    %82 = vector.extract_strided_slice %49 {offsets = [0, 2], sizes = [2, 1], strides = [1, 1]} : vector<2x4xf32> to vector<2x1xf32>
    %83 = vector.shape_cast %81 : vector<1x128xi1> to vector<1x128xi1>
    %84 = vector.broadcast %83 : vector<1x128xi1> to vector<2x128xi1>
    %85 = vector.shape_cast %82 : vector<2x1xf32> to vector<2x1xf32>
    %86 = vector.broadcast %85 : vector<2x1xf32> to vector<2x128xf32>
    %87 = arith.select %84, %86, %76 : vector<2x128xi1>, vector<2x128xf32>
    %c96_i32_21 = arith.constant 96 : i32
    %88 = vector.broadcast %c96_i32_21 : i32 to vector<1x128xi32>
    %89 = arith.cmpi sge, %53, %88 : vector<1x128xi32>
    %c128_i32 = arith.constant 128 : i32
    %90 = vector.broadcast %c128_i32 : i32 to vector<1x128xi32>
    %91 = arith.cmpi slt, %53, %90 : vector<1x128xi32>
    %92 = arith.andi %89, %91 : vector<1x128xi1>
    %93 = vector.extract_strided_slice %49 {offsets = [0, 3], sizes = [2, 1], strides = [1, 1]} : vector<2x4xf32> to vector<2x1xf32>
    %94 = vector.shape_cast %92 : vector<1x128xi1> to vector<1x128xi1>
    %95 = vector.broadcast %94 : vector<1x128xi1> to vector<2x128xi1>
    %96 = vector.shape_cast %93 : vector<2x1xf32> to vector<2x1xf32>
    %97 = vector.broadcast %96 : vector<2x1xf32> to vector<2x128xf32>
    %98 = arith.select %95, %97, %87 : vector<2x128xi1>, vector<2x128xf32>
    %99 = vector.shape_cast %52 : vector<16x128xf32> to vector<2x8x128xf32>
    %100 = vector.shape_cast %98 : vector<2x128xf32> to vector<2x1x128xf32>
    %101 = vector.broadcast %100 : vector<2x1x128xf32> to vector<2x8x128xf32>
    %102 = arith.mulf %99, %101 : vector<2x8x128xf32>
    %103 = vector.shape_cast %102 : vector<2x8x128xf32> to vector<16x128xf32>
    %c0_22 = arith.constant 0 : index
    %c0_23 = arith.constant 0 : index
    %104 = vector.load %arg5[%c0_22, %c0_23] : memref<128x128xf32, #tpu.memory_space<vmem>>, vector<128x128xf32>
    %cst_24 = arith.constant dense<0.000000e+00> : vector<16x128xf32>
    %105 = tpu.matmul %103, %104, %cst_24 {dimension_numbers = #tpu.dot_dimension_numbers<[1], [0], [0], [1], [0, 0, 1, 1], [], []>} : vector<16x128xf32>, vector<128x128xf32>, vector<16x128xf32> -> vector<16x128xf32>
    %106 = vector.shape_cast %105 : vector<16x128xf32> to vector<2x8x128xf32>
    %c0_25 = arith.constant 0 : index
    %c0_26 = arith.constant 0 : index
    %c0_27 = arith.constant 0 : index
    %107 = vector.load %arg6[%c0_25, %c0_26, %c0_27] : memref<2x8x128xf32, #tpu.memory_space<vmem>>, vector<2x8x128xf32>
    tpu.vector_store %arg6[%c0_25, %c0_26, %c0_27], %106 {strides = array<i32>} : memref<2x8x128xf32, #tpu.memory_space<vmem>>, vector<2x8x128xf32>,
    return
  }
  func.func @transform_0(%arg0: i32) -> (i32, i32, i32) {
    %c0_i32 = arith.constant 0 : i32
    %c0_i32_0 = arith.constant 0 : i32
    %c0_i32_1 = arith.constant 0 : i32
    return %arg0, %c0_i32, %c0_i32_0 : i32, i32, i32
  }
  func.func @transform_1(%arg0: i32) -> (i32, i32) {
    %c0_i32 = arith.constant 0 : i32
    %c0_i32_0 = arith.constant 0 : i32
    %c0_i32_1 = arith.constant 0 : i32
    return %c0_i32, %c0_i32_0 : i32, i32
  }
  func.func @transform_2(%arg0: i32) -> (i32, i32) {
    %c0_i32 = arith.constant 0 : i32
    %c0_i32_0 = arith.constant 0 : i32
    %c0_i32_1 = arith.constant 0 : i32
    return %c0_i32, %c0_i32_0 : i32, i32
  }
  func.func @transform_3(%arg0: i32) -> (i32, i32) {
    %c0_i32 = arith.constant 0 : i32
    %c0_i32_0 = arith.constant 0 : i32
    %c0_i32_1 = arith.constant 0 : i32
    return %c0_i32, %c0_i32_0 : i32, i32
  }
  func.func @transform_4(%arg0: i32) -> (i32, i32) {
    %c0_i32 = arith.constant 0 : i32
    %c0_i32_0 = arith.constant 0 : i32
    %c0_i32_1 = arith.constant 0 : i32
    return %c0_i32, %c0_i32_0 : i32, i32
  }
  func.func @transform_5(%arg0: i32) -> (i32, i32, i32) {
    %c0_i32 = arith.constant 0 : i32
    %c0_i32_0 = arith.constant 0 : i32
    %c0_i32_1 = arith.constant 0 : i32
    return %arg0, %c0_i32, %c0_i32_0 : i32, i32, i32
  }
}

</mosaic_0001>

<llo_original>
// kernel: tpu_custom_call.1
$region0: #{tpu_custom_call.1}
  #allocation0 [shape = 'u32[]', space=smem, size = 0x4, offset = 0x4, fixed_abs, tag = 'smem constant byte address 0x4 - core index']
  #allocation1 [shape = 'u32[144,128]{1,0:T(1,128)}', space=vmem, size = 0x12000, scoped, tag = 'internal scratch']
  %s0 = inlined_call_operand.hbm [shape: f32[2,8,32], index: 0, kind: input, shape index: {}]
  %s1 = inlined_call_operand.vmem [shape: f32[32,4], index: 1, kind: input, shape index: {}]
  %s2 = inlined_call_operand.vmem [shape: f32[3,32], index: 2, kind: input, shape index: {}]
  %s3 = inlined_call_operand.vmem [shape: f32[32,128], index: 3, kind: input, shape index: {}]
  %s4 = inlined_call_operand.hbm [shape: f32[128,128], index: 4, kind: input, shape index: {}]
  %s5 = inlined_call_operand.hbm [shape: f32[2,8,128], index: 5, kind: output, shape index: {}]
  %s6 = sld [smem:[#allocation0]]
  $region38: #{tpu_custom_call.1} parent=0
    _
  %s8 = ssub.s32 1, %s6
  %s9 = scalar_select 0, %s8, %s6
  $region1: #{tpu_custom_call.1} parent=0
    #allocation2 [shape = 'u8[8192]{0}', space=vmem, size = 0x2000, scoped, tag = 'input window, operand 0, single buffered']
    #allocation3 [shape = 's32[1]{0}', space=sflag, size = 0x4, scoped, tag = 'scoped memory for tpu_custom_call.1']
    #allocation4 [shape = 's32[1]{0}', space=sflag, size = 0x4, scoped, tag = 'scoped memory for tpu_custom_call.1']
    #allocation5 [shape = 'u8[65536]{0}', space=vmem, size = 0x10000, scoped, tag = 'input window, operand 4, single buffered']
    #allocation6 [shape = 's32[1]{0}', space=sflag, size = 0x4, scoped, tag = 'scoped memory for tpu_custom_call.1']
    #allocation7 [shape = 'u8[8192]{0}', space=vmem, size = 0x2000, scoped, tag = 'output window, operand 0, single buffered']
    %10 = vsyncpa [#allocation3], 0
    %11 = vsyncpa [#allocation6], 0
    %12 = vsyncpa [#allocation4], 0
    // Predicated region
    $region2: #{tpu_custom_call.1} parent=1 // pred_check
      _
    $region3: #{tpu_custom_call.1} parent=1 // pred_check_branch
      %14 = sbr.rel (0) target = $region5
    $region4: #{tpu_custom_call.1} parent=1 // pred_region
      %s16 = ssub.s32 256, 256
      %17 = vsyncadd [#allocation3], %s16
      %s18 = sshll.u32 [#allocation2], 4
      %s19 = int_to_ptr.vmem [resolvable:$true] %s18
      %24 = dma.hbm_to_vmem [thread:$0]  %s0, 256, %s19, [#allocation3], 128, 128, 8
    $region5: #{tpu_custom_call.1} parent=1 // pred_fallthru
      _
    // Predicated region
    $region6: #{tpu_custom_call.1} parent=1 // pred_check
      _
    $region7: #{tpu_custom_call.1} parent=1 // pred_check_branch
      %26 = sbr.rel (0) target = $region9
    $region8: #{tpu_custom_call.1} parent=1 // pred_region
      _
    $region9: #{tpu_custom_call.1} parent=1 // pred_fallthru
      _
    // Predicated region
    $region10: #{tpu_custom_call.1} parent=1 // pred_check
      _
    $region11: #{tpu_custom_call.1} parent=1 // pred_check_branch
      %28 = sbr.rel (0) target = $region13
    $region12: #{tpu_custom_call.1} parent=1 // pred_region
      _
    $region13: #{tpu_custom_call.1} parent=1 // pred_fallthru
      _
    // Predicated region
    $region14: #{tpu_custom_call.1} parent=1 // pred_check
      _
    $region15: #{tpu_custom_call.1} parent=1 // pred_check_branch
      %30 = sbr.rel (0) target = $region17
    $region16: #{tpu_custom_call.1} parent=1 // pred_region
      _
    $region17: #{tpu_custom_call.1} parent=1 // pred_fallthru
      _
    // Predicated region
    $region18: #{tpu_custom_call.1} parent=1 // pred_check
      _
    $region19: #{tpu_custom_call.1} parent=1 // pred_check_branch
      %32 = sbr.rel (0) target = $region21
    $region20: #{tpu_custom_call.1} parent=1 // pred_region
      %s34 = ssub.s32 2048, 2048
      %35 = vsyncadd [#allocation6], %s34
      %s36 = sshll.u32 [#allocation5], 4
      %s37 = int_to_ptr.vmem [resolvable:$true] %s36
      %42 = dma.hbm_to_vmem [thread:$0]  %s4, 2048, %s37, [#allocation6], 128, 128, 8
    $region21: #{tpu_custom_call.1} parent=1 // pred_fallthru
      _
    // Predicated region
    $region22: #{tpu_custom_call.1} parent=1 // pred_check
      _
    $region23: #{tpu_custom_call.1} parent=1 // pred_check_branch
      %44 = sbr.rel (0) target = $region25
    $region24: #{tpu_custom_call.1} parent=1 // pred_region
      %45 = dma.done [#allocation3], 256
    $region25: #{tpu_custom_call.1} parent=1 // pred_fallthru
      _
    // Predicated region
    $region26: #{tpu_custom_call.1} parent=1 // pred_check
      _
    $region27: #{tpu_custom_call.1} parent=1 // pred_check_branch
      %47 = sbr.rel (0) target = $region29
    $region28: #{tpu_custom_call.1} parent=1 // pred_region
      %48 = dma.done [#allocation6], 2048
    $region29: #{tpu_custom_call.1} parent=1 // pred_fallthru
      _
    %v49 = vld [vmem:[#allocation2] sm:$0xff]
    %v50 = vld [vmem:[#allocation2 + $0x8] sm:$0xff]
    %v51 = vld [vmem:[%s2] sm:$0x7]
    %vm52 = vcmask 261120
    %v53 = vsel %vm52, %v49, 0.0
    %54 = vadd.xlane.f32.xlu0 %v53
    %v55 = vpop.xlane.xlu0 %54
    %v56 = vsel %vm52, %v50, 0.0
    %57 = vadd.xlane.f32.xlu0 %v56
    %v58 = vpop.xlane.xlu0 %57
    %v59 = vrcp.pop 32.0
    %v60 = vmul.f32 %v55, %v59
    %v61 = vmul.f32 %v58, %v59
    %v62 = vsub.f32 %v49, %v60
    %v63 = vsub.f32 %v50, %v61
    %v64 = vmul.f32 %v62, %v62
    %v65 = vmul.f32 %v63, %v63
    %v66 = vsel %vm52, %v64, 0.0
    %67 = vadd.xlane.f32.xlu0 %v66
    %v68 = vpop.xlane.xlu0 %67
    %v69 = vsel %vm52, %v65, 0.0
    %70 = vadd.xlane.f32.xlu0 %v69
    %v71 = vpop.xlane.xlu0 %70
    %v72 = vmul.f32 %v68, %v59
    %v73 = vmul.f32 %v71, %v59
    %v74 = vadd.f32 %v72, 1e-05
    %v75 = vadd.f32 %v73, 1e-05
    %v76 = vrsqrt.pop %v74
    %v77 = vrsqrt.pop %v75
    %v78 = vmul.f32 %v62, %v76
    %v79 = vmul.f32 %v63, %v77
    %v80 = vlaneseq
    %v81 = vshrl.u32 %v80, 7
    %v82 = vsub.s32 1, %v81
    %v83 = vrot.slane %v51, %v82
    %v84 = vmul.f32 %v78, %v83
    %v85 = vmul.f32 %v79, %v83
    %v86 = vlaneseq
    %v87 = vshrl.u32 %v86, 7
    %v88 = vsub.s32 2, %v87
    %v89 = vrot.slane %v51, %v88
    %v90 = vadd.f32 %v84, %v89
    %v91 = vadd.f32 %v85, %v89
    %v92 = vld [vmem:[%s1] sm:$0xff]
    %v93 = vld [vmem:[%s1 + $0x8] sm:$0xff]
    %v94 = vld [vmem:[%s1 + $0x10] sm:$0xff]
    %v95 = vld [vmem:[%s1 + $0x18] sm:$0xff]
    %v96 = vlaneseq
    %v97 = vshrl.u32 %v96, 7
    %v98 = vsub.s32 0, %v97
    %v99 = vrot.slane %v51, %v98
    %v101 = vsel %vm52, %v49, 0
    %v104 = vsel %vm52, %v50, 0
    %106 = vmatprep.subr.mxu0 0.0
    %107 = vmatpush1.msra.mxu0 %v92
    %108 = vmatprep.subr.mxu0 0.0
    %109 = vmatpush1.msra.mxu0 %v93
    %110 = vmatprep.subr.mxu0 0.0
    %111 = vmatpush1.msra.mxu0 %v94
    %112 = vmatprep.subr.mxu0 0.0
    %113 = vmatpush1.msra.mxu0 %v95
    %114 = vmatprep.subr.mxu0 0.0
    %115 = vmatpush1.msra.mxu0 0.0
    %116 = vmatprep.subr.mxu0 0.0
    %117 = vmatpush1.msra.mxu0 0.0
    %118 = vmatprep.subr.mxu0 0.0
    %119 = vmatpush1.msra.mxu0 0.0
    %120 = vmatprep.subr.mxu0 0.0
    %121 = vmatpush1.msra.mxu0 0.0
    %122 = vmatprep.subr.mxu0 0.0
    %123 = vmatpush1.msra.mxu0 0.0
    %124 = vmatprep.subr.mxu0 0.0
    %125 = vmatpush1.msra.mxu0 0.0
    %126 = vmatprep.subr.mxu0 0.0
    %127 = vmatpush1.msra.mxu0 0.0
    %128 = vmatprep.subr.mxu0 0.0
    %129 = vmatpush1.msra.mxu0 0.0
    %130 = vmatprep.subr.mxu0 0.0
    %131 = vmatpush1.msra.mxu0 0.0
    %132 = vmatprep.subr.mxu0 0.0
    %133 = vmatpush1.msra.mxu0 0.0
    %134 = vmatprep.subr.mxu0 0.0
    %135 = vmatpush1.msra.mxu0 0.0
    %136 = vmatprep.subr.mxu0 0.0
    %137 = vmatpush1.msra.mxu0 0.0
    %138 = vmatprep.subr.mxu0 0.0
    %139 = vmatpush1.msra.mxu0 0.0
    %140 = vmatprep.subr.mxu0 0.0
    %141 = vmatpush1.msra.mxu0 0.0
    %142 = vmatprep.subr.mxu0 0.0
    %143 = vmatpush1.msra.mxu0 0.0
    %144 = vmatprep.subr.mxu0 0.0
    %145 = vmatpush1.msra.mxu0 0.0
    %146 = vmatprep.subr.mxu0 0.0
    %147 = vmatpush1.msra.mxu0 0.0
    %148 = vmatprep.subr.mxu0 0.0
    %149 = vmatpush1.msra.mxu0 0.0
    %150 = vmatprep.subr.mxu0 0.0
    %151 = vmatpush1.msra.mxu0 0.0
    %152 = vmatprep.subr.mxu0 0.0
    %153 = vmatpush1.msra.mxu0 0.0
    %154 = vmatprep.subr.mxu0 0.0
    %155 = vmatpush1.msra.mxu0 0.0
    %156 = vmatprep.subr.mxu0 0.0
    %157 = vmatpush1.msra.mxu0 0.0
    %158 = vmatprep.subr.mxu0 0.0
    %159 = vmatpush1.msra.mxu0 0.0
    %160 = vmatprep.subr.mxu0 0.0
    %161 = vmatpush1.msra.mxu0 0.0
    %162 = vmatprep.subr.mxu0 0.0
    %163 = vmatpush1.msra.mxu0 0.0
    %164 = vmatprep.subr.mxu0 0.0
    %165 = vmatpush1.msra.mxu0 0.0
    %166 = vmatprep.subr.mxu0 0.0
    %167 = vmatpush1.msra.mxu0 0.0
    %168 = vmatprep.subr.mxu0 0.0
    %169 = vmatpush1.msra.mxu0 0.0
    %170 = vmatprep.mubr.f32.mxu0 0.0
    %171 = vmatmul.mubr.f32.gmra.mrb[0].mxu0 %v101
    %v172 = vpop.f32.mrb[0].mxu0
    %v173 = vadd.f32 %v99, %v172
    %v174 = vpop.f32.mrb[0].mxu0
    %175 = vmatprep.mubr.f32.mxu0 0.0
    %176 = vmatmul.mubr.f32.gmra.mrb[0].mxu0 %v104
    %v177 = vpop.f32.mrb[0].mxu0
    %v178 = vadd.f32 %v99, %v177
    %v179 = vpop.f32.mrb[0].mxu0
    %180 = vdwg.mxu0
    %v181 = vxor.u32 %v173, 2147483648
    %v182 = vxor.u32 %v178, 2147483648
    %v183 = vmul.f32 %v181, 1.442695
    %v184 = vpow.pop %v183
    %v185 = vmul.f32 %v182, 1.442695
    %v186 = vpow.pop %v185
    %v187 = vadd.f32 %v184, 1.0
    %v188 = vadd.f32 %v186, 1.0
    %v189 = vrcp.pop %v187
    %v190 = vmul.f32 1.0, %v189
    %v191 = vrcp.pop %v188
    %v192 = vmul.f32 1.0, %v191
    %vm193 = vcmask 31744
    %v194 = vsel %vm193, %v190, 0.0
    %v195 = vrot.slane %v194, 4
    %v196 = vadd.f32 %v194, %v195
    %v197 = vrot.slane %v196, 2
    %v198 = vadd.f32 %v196, %v197
    %v199 = vrot.slane %v198, 1
    %v200 = vadd.f32 %v198, %v199
    %v201 = vsel %vm193, %v192, 0.0
    %v202 = vrot.slane %v201, 4
    %v203 = vadd.f32 %v201, %v202
    %v204 = vrot.slane %v203, 2
    %v205 = vadd.f32 %v203, %v204
    %v206 = vrot.slane %v205, 1
    %v207 = vadd.f32 %v205, %v206
    %vm210 = vcmask 1041409
    %v211 = vsel %vm210, %v207, %v200
    %vm213 = vcmask 25600
    %v214 = vsel %vm213, %v211, -inf
    %215 = vmax.xlane.f32.xlu0 %v214
    %v216 = vpop.xlane.xlu0 %215
    %v218 = vrot.slane %v216, 1
    %v221 = vsub.f32 %v200, %v216
    %v222 = vsub.f32 %v207, %v218
    %v223 = vmul.f32 %v221, 1.442695
    %v224 = vpow.pop %v223
    %v225 = vmul.f32 %v222, 1.442695
    %v226 = vpow.pop %v225
    %v229 = vrot.slane %v226, 7
    %v230 = vsel %vm210, %v229, %v224
    %v232 = vsel %vm213, %v230, 0.0
    %233 = vadd.xlane.f32.xlu0 %v232
    %v234 = vpop.xlane.xlu0 %233
    %v236 = vrot.slane %v234, 1
    %v239 = vrcp.pop %v234
    %v240 = vmul.f32 %v224, %v239
    %v241 = vrcp.pop %v236
    %v242 = vmul.f32 %v226, %v241
    %v243 = vld [vmem:[%s3] sm:$0xff]
    %v244 = vld [vmem:[%s3 + $0x8] sm:$0xff]
    %v245 = vld [vmem:[%s3 + $0x10] sm:$0xff]
    %v246 = vld [vmem:[%s3 + $0x18] sm:$0xff]
    %v248 = vsel %vm52, %v90, 0
    %v251 = vsel %vm52, %v91, 0
    %253 = vmatprep.subr.mxu0 0.0
    %254 = vmatpush1.msra.mxu0 %v243
    %255 = vmatprep.subr.mxu0 0.0
    %256 = vmatpush1.msra.mxu0 %v244
    %257 = vmatprep.subr.mxu0 0.0
    %258 = vmatpush1.msra.mxu0 %v245
    %259 = vmatprep.subr.mxu0 0.0
    %260 = vmatpush1.msra.mxu0 %v246
    %261 = vmatprep.subr.mxu0 0.0
    %262 = vmatpush1.msra.mxu0 0.0
    %263 = vmatprep.subr.mxu0 0.0
    %264 = vmatpush1.msra.mxu0 0.0
    %265 = vmatprep.subr.mxu0 0.0
    %266 = vmatpush1.msra.mxu0 0.0
    %267 = vmatprep.subr.mxu0 0.0
    %268 = vmatpush1.msra.mxu0 0.0
    %269 = vmatprep.subr.mxu0 0.0
    %270 = vmatpush1.msra.mxu0 0.0
    %271 = vmatprep.subr.mxu0 0.0
    %272 = vmatpush1.msra.mxu0 0.0
    %273 = vmatprep.subr.mxu0 0.0
    %274 = vmatpush1.msra.mxu0 0.0
    %275 = vmatprep.subr.mxu0 0.0
    %276 = vmatpush1.msra.mxu0 0.0
    %277 = vmatprep.subr.mxu0 0.0
    %278 = vmatpush1.msra.mxu0 0.0
    %279 = vmatprep.subr.mxu0 0.0
    %280 = vmatpush1.msra.mxu0 0.0
    %281 = vmatprep.subr.mxu0 0.0
    %282 = vmatpush1.msra.mxu0 0.0
    %283 = vmatprep.subr.mxu0 0.0
    %284 = vmatpush1.msra.mxu0 0.0
    %285 = vmatprep.subr.mxu0 0.0
    %286 = vmatpush1.msra.mxu0 0.0
    %287 = vmatprep.subr.mxu0 0.0
    %288 = vmatpush1.msra.mxu0 0.0
    %289 = vmatprep.subr.mxu0 0.0
    %290 = vmatpush1.msra.mxu0 0.0
    %291 = vmatprep.subr.mxu0 0.0
    %292 = vmatpush1.msra.mxu0 0.0
    %293 = vmatprep.subr.mxu0 0.0
    %294 = vmatpush1.msra.mxu0 0.0
    %295 = vmatprep.subr.mxu0 0.0
    %296 = vmatpush1.msra.mxu0 0.0
    %297 = vmatprep.subr.mxu0 0.0
    %298 = vmatpush1.msra.mxu0 0.0
    %299 = vmatprep.subr.mxu0 0.0
    %300 = vmatpush1.msra.mxu0 0.0
    %301 = vmatprep.subr.mxu0 0.0
    %302 = vmatpush1.msra.mxu0 0.0
    %303 = vmatprep.subr.mxu0 0.0
    %304 = vmatpush1.msra.mxu0 0.0
    %305 = vmatprep.subr.mxu0 0.0
    %306 = vmatpush1.msra.mxu0 0.0
    %307 = vmatprep.subr.mxu0 0.0
    %308 = vmatpush1.msra.mxu0 0.0
    %309 = vmatprep.subr.mxu0 0.0
    %310 = vmatpush1.msra.mxu0 0.0
    %311 = vmatprep.subr.mxu0 0.0
    %312 = vmatpush1.msra.mxu0 0.0
    %313 = vmatprep.subr.mxu0 0.0
    %314 = vmatpush1.msra.mxu0 0.0
    %315 = vmatprep.subr.mxu0 0.0
    %316 = vmatpush1.msra.mxu0 0.0
    %317 = vmatprep.mubr.f32.mxu0 0.0
    %318 = vmatmul.mubr.f32.gmra.mrb[0].mxu0 %v248
    %v319 = vpop.f32.mrb[0].mxu0
    %v320 = vadd.f32 0.0, %v319
    %v321 = vpop.f32.mrb[0].mxu0
    %322 = vmatprep.mubr.f32.mxu0 0.0
    %323 = vmatmul.mubr.f32.gmra.mrb[0].mxu0 %v251
    %v324 = vpop.f32.mrb[0].mxu0
    %v325 = vadd.f32 0.0, %v324
    %v326 = vpop.f32.mrb[0].mxu0
    %327 = vdwg.mxu0
    %v328 = vlaneseq
    %v329 = vand.u32 %v328, 127
    %vm330 = vcmp.ge.s32.totalorder %v329, 0
    %vm331 = vcmp.lt.s32.totalorder %v329, 32
    %vm332 = vmand %vm330, %vm331
    %v333 = vsel %vm332, 1, 0
    %vm334 = vcmp.eq.s32.totalorder %v333, 1
    %336 = vset.pattern.permute.xlu0 0
    %337 = vperm.xlu0 %336, %v240
    %v338 = vpop.permute.xlu0 %337
    %340 = vset.pattern.permute.xlu0 0
    %341 = vperm.xlu0 %340, %v242
    %v342 = vpop.permute.xlu0 %341
    %v343 = vrot.slane %v342, 7
    %v344 = vsel %vm210, %v343, %v338
    %v346 = vsel %vm334, %v344, 0.0
    %vm347 = vcmp.ge.s32.totalorder %v329, 32
    %vm348 = vcmp.lt.s32.totalorder %v329, 64
    %vm349 = vmand %vm347, %vm348
    %v350 = vsel %vm349, 1, 0
    %vm351 = vcmp.eq.s32.totalorder %v350, 1
    %352 = vset.pattern.permute.xlu0 1
    %353 = vperm.xlu0 %352, %v240
    %v354 = vpop.permute.xlu0 %353
    %355 = vset.pattern.permute.xlu0 1
    %356 = vperm.xlu0 %355, %v242
    %v357 = vpop.permute.xlu0 %356
    %v358 = vrot.slane %v357, 7
    %v359 = vsel %vm210, %v358, %v354
    %v361 = vsel %vm351, %v359, %v346
    %vm362 = vcmp.ge.s32.totalorder %v329, 64
    %vm363 = vcmp.lt.s32.totalorder %v329, 96
    %vm364 = vmand %vm362, %vm363
    %v365 = vsel %vm364, 1, 0
    %vm366 = vcmp.eq.s32.totalorder %v365, 1
    %367 = vset.pattern.permute.xlu0 2
    %368 = vperm.xlu0 %367, %v240
    %v369 = vpop.permute.xlu0 %368
    %370 = vset.pattern.permute.xlu0 2
    %371 = vperm.xlu0 %370, %v242
    %v372 = vpop.permute.xlu0 %371
    %v373 = vrot.slane %v372, 7
    %v374 = vsel %vm210, %v373, %v369
    %v376 = vsel %vm366, %v374, %v361
    %vm377 = vcmp.ge.s32.totalorder %v329, 96
    %vm378 = vcmp.lt.s32.totalorder %v329, 128
    %vm379 = vmand %vm377, %vm378
    %v380 = vsel %vm379, 1, 0
    %vm381 = vcmp.eq.s32.totalorder %v380, 1
    %382 = vset.pattern.permute.xlu0 3
    %383 = vperm.xlu0 %382, %v240
    %v384 = vpop.permute.xlu0 %383
    %385 = vset.pattern.permute.xlu0 3
    %386 = vperm.xlu0 %385, %v242
    %v387 = vpop.permute.xlu0 %386
    %v388 = vrot.slane %v387, 7
    %v389 = vsel %vm210, %v388, %v384
    %v391 = vsel %vm381, %v389, %v376
    %v394 = vunpack.c.l.s4 1966171168
    %v395 = vunpack.c.0.s8 %v394
    %v396 = vlaneseq
    %v397 = vshrl.u32 %v396, 7
    %v398 = vsub.s32 %v395, %v397
    %v399 = vrot.slane %v391, %v398
    %v400 = vcombine.high %v399, %v399
    %v402 = vunpack.c.l.s4 1966171168
    %v403 = vunpack.c.0.s8 %v402
    %v404 = vlaneseq
    %v405 = vshrl.u32 %v404, 7
    %v406 = vsub.s32 %v403, %v405
    %v407 = vrot.slane %v399, %v406
    %v409 = vunpack.c.l.s4 1966171168
    %v410 = vunpack.c.0.s8 %v409
    %v411 = vlaneseq
    %v412 = vshrl.u32 %v411, 7
    %v413 = vsub.s32 %v410, %v412
    %v414 = vrot.slane %v400, %v413
    %v415 = vlaneseq
    %v416 = vshrl.u32 %v415, 7
    %v417 = vsub.s32 0, %v416
    %v418 = vrot.slane %v407, %v417
    %v419 = vlaneseq
    %v420 = vshrl.u32 %v419, 7
    %v421 = vsub.s32 0, %v420
    %v422 = vrot.slane %v414, %v421
    %v425 = vmul.f32 %v320, %v418
    %v426 = vmul.f32 %v325, %v422
    %v427 = vld [vmem:[#allocation5] sm:$0xff]
    %v428 = vld [vmem:[#allocation5 + $0x8] sm:$0xff]
    %v429 = vld [vmem:[#allocation5 + $0x10] sm:$0xff]
    %v430 = vld [vmem:[#allocation5 + $0x18] sm:$0xff]
    %v431 = vld [vmem:[#allocation5 + $0x20] sm:$0xff]
    %v432 = vld [vmem:[#allocation5 + $0x28] sm:$0xff]
    %v433 = vld [vmem:[#allocation5 + $0x30] sm:$0xff]
    %v434 = vld [vmem:[#allocation5 + $0x38] sm:$0xff]
    %v435 = vld [vmem:[#allocation5 + $0x40] sm:$0xff]
    %v436 = vld [vmem:[#allocation5 + $0x48] sm:$0xff]
    %v437 = vld [vmem:[#allocation5 + $0x50] sm:$0xff]
    %v438 = vld [vmem:[#allocation5 + $0x58] sm:$0xff]
    %v439 = vld [vmem:[#allocation5 + $0x60] sm:$0xff]
    %v440 = vld [vmem:[#allocation5 + $0x68] sm:$0xff]
    %v441 = vld [vmem:[#allocation5 + $0x70] sm:$0xff]
    %v442 = vld [vmem:[#allocation5 + $0x78] sm:$0xff]
    %443 = vmatprep.subr.mxu0 0.0
    %444 = vmatpush1.msra.mxu0 %v427
    %445 = vmatprep.subr.mxu0 0.0
    %446 = vmatpush1.msra.mxu0 %v428
    %447 = vmatprep.subr.mxu0 0.0
    %448 = vmatpush1.msra.mxu0 %v429
    %449 = vmatprep.subr.mxu0 0.0
    %450 = vmatpush1.msra.mxu0 %v430
    %451 = vmatprep.subr.mxu0 0.0
    %452 = vmatpush1.msra.mxu0 %v431
    %453 = vmatprep.subr.mxu0 0.0
    %454 = vmatpush1.msra.mxu0 %v432
    %455 = vmatprep.subr.mxu0 0.0
    %456 = vmatpush1.msra.mxu0 %v433
    %457 = vmatprep.subr.mxu0 0.0
    %458 = vmatpush1.msra.mxu0 %v434
    %459 = vmatprep.subr.mxu0 0.0
    %460 = vmatpush1.msra.mxu0 %v435
    %461 = vmatprep.subr.mxu0 0.0
    %462 = vmatpush1.msra.mxu0 %v436
    %463 = vmatprep.subr.mxu0 0.0
    %464 = vmatpush1.msra.mxu0 %v437
    %465 = vmatprep.subr.mxu0 0.0
    %466 = vmatpush1.msra.mxu0 %v438
    %467 = vmatprep.subr.mxu0 0.0
    %468 = vmatpush1.msra.mxu0 %v439
    %469 = vmatprep.subr.mxu0 0.0
    %470 = vmatpush1.msra.mxu0 %v440
    %471 = vmatprep.subr.mxu0 0.0
    %472 = vmatpush1.msra.mxu0 %v441
    %473 = vmatprep.subr.mxu0 0.0
    %474 = vmatpush1.msra.mxu0 %v442
    %475 = vmatprep.subr.mxu0 0.0
    %476 = vmatpush1.msra.mxu0 0.0
    %477 = vmatprep.subr.mxu0 0.0
    %478 = vmatpush1.msra.mxu0 0.0
    %479 = vmatprep.subr.mxu0 0.0
    %480 = vmatpush1.msra.mxu0 0.0
    %481 = vmatprep.subr.mxu0 0.0
    %482 = vmatpush1.msra.mxu0 0.0
    %483 = vmatprep.subr.mxu0 0.0
    %484 = vmatpush1.msra.mxu0 0.0
    %485 = vmatprep.subr.mxu0 0.0
    %486 = vmatpush1.msra.mxu0 0.0
    %487 = vmatprep.subr.mxu0 0.0
    %488 = vmatpush1.msra.mxu0 0.0
    %489 = vmatprep.subr.mxu0 0.0
    %490 = vmatpush1.msra.mxu0 0.0
    %491 = vmatprep.subr.mxu0 0.0
    %492 = vmatpush1.msra.mxu0 0.0
    %493 = vmatprep.subr.mxu0 0.0
    %494 = vmatpush1.msra.mxu0 0.0
    %495 = vmatprep.subr.mxu0 0.0
    %496 = vmatpush1.msra.mxu0 0.0
    %497 = vmatprep.subr.mxu0 0.0
    %498 = vmatpush1.msra.mxu0 0.0
    %499 = vmatprep.subr.mxu0 0.0
    %500 = vmatpush1.msra.mxu0 0.0
    %501 = vmatprep.subr.mxu0 0.0
    %502 = vmatpush1.msra.mxu0 0.0
    %503 = vmatprep.subr.mxu0 0.0
    %504 = vmatpush1.msra.mxu0 0.0
    %505 = vmatprep.subr.mxu0 0.0
    %506 = vmatpush1.msra.mxu0 0.0
    %507 = vmatprep.mubr.f32.mxu0 0.0
    %508 = vmatmul.mubr.f32.gmra.mrb[0].mxu0 %v425
    %v509 = vpop.f32.mrb[0].mxu0
    %v510 = vadd.f32 0.0, %v509
    %v511 = vpop.f32.mrb[0].mxu0
    %512 = vmatprep.mubr.f32.mxu0 0.0
    %513 = vmatmul.mubr.f32.gmra.mrb[0].mxu0 %v426
    %v514 = vpop.f32.mrb[0].mxu0
    %v515 = vadd.f32 0.0, %v514
    %v516 = vpop.f32.mrb[0].mxu0
    %517 = vdwg.mxu0
    %518 = vst [vmem:[#allocation7] sm:$0xff] %v510
    %519 = vst [vmem:[#allocation7 + $0x8] sm:$0xff] %v515
    // Predicated region
    $region30: #{tpu_custom_call.1} parent=1 // pred_check
      _
    $region31: #{tpu_custom_call.1} parent=1 // pred_check_branch
      %521 = sbr.rel (0) target = $region33
    $region32: #{tpu_custom_call.1} parent=1 // pred_region
      %s523 = ssub.s32 256, 256
      %524 = vsyncadd [#allocation4], %s523
      %s525 = sshll.u32 [#allocation7], 4
      %s526 = int_to_ptr.vmem [resolvable:$true] %s525
      %531 = dma.vmem_to_hbm [thread:$0]  %s526, 256, %s5, [#allocation4], 128, 128, 8
    $region33: #{tpu_custom_call.1} parent=1 // pred_fallthru
      _
    // Predicated region
    $region34: #{tpu_custom_call.1} parent=1 // pred_check
      _
    $region35: #{tpu_custom_call.1} parent=1 // pred_check_branch
      %533 = sbr.rel (0) target = $region37
    $region36: #{tpu_custom_call.1} parent=1 // pred_region
      %534 = dma.done [#allocation4], 256
    $region37: #{tpu_custom_call.1} parent=1 // pred_fallthru
      _
    %535 = vsyncpa [#allocation3], 1
    %536 = vsyncpa [#allocation6], 1
    %537 = vsyncpa [#allocation4], 1

</llo_original>
